<compile_context>
chip_gen: v5e
topology: v5e:2x2
jax: 0.10.0
libtpu: 0.0.40
codegen_flags: <defaults>
</compile_context>

<pallas_src>
import functools

import jax
import jax.numpy as jnp
from jax.experimental import pallas as pl
from jax.experimental.pallas import tpu as pltpu


def _round_up(a, b):
    return ((a + b - 1) // b) * b


def _pick_tile_rows(total, cap):
    """Row-tile size: multiple of 8 (or the full extent), capped, split into
    >= 2 grid steps when legal so the v7x megacore keeps both cores busy."""
    cap = max(8, (cap // 8) * 8)
    if total >= 2 * cap:
        return cap
    half = _round_up(pl.cdiv(total, 2), 8)
    if half < total:
        return half
    return total  # single step; a full-extent block is always a legal shape


def _vmem_limit(in_tile_bytes, out_tile_bytes, misc_bytes):
    # Double-buffered input/output tiles + weights + compiler headroom.
    footprint = 2 * in_tile_bytes + 2 * out_tile_bytes + misc_bytes
    return int(footprint) + 16 * 1024 * 1024


def _packed_readout_kernel(x_ref, wp_ref, b_ref, o_ref):
    # x_ref:  (tile_m, 128)  lane-dense packed rows (128//D original rows each)
    # wp_ref: (128, F)       block-diagonal replication of w (F = 128 // D)
    # b_ref:  (1, 1)         scalar bias in SMEM
    # o_ref:  (tile_m, F)
    acc = jnp.dot(x_ref[...], wp_ref[...], preferred_element_type=jnp.float32)
    o_ref[...] = (acc + b_ref[0, 0]).astype(o_ref.dtype)


def _rowwise_readout_kernel(x_ref, w_ref, b_ref, o_ref):
    # x_ref: (tile_n, D); w_ref: (D, 1); b_ref: (1, 1) SMEM; o_ref: (tile_n, 1)
    acc = jnp.dot(x_ref[...], w_ref[...], preferred_element_type=jnp.float32)
    o_ref[...] = (acc + b_ref[0, 0]).astype(o_ref.dtype)


@functools.partial(jax.jit, static_argnames=("tile_bytes", "min_rows_for_kernel"))
def squeeze_end_forward(x, w, b, *, tile_bytes=4 * 1024 * 1024,
                        min_rows_for_kernel=4096):
    """Computes Linear(D->1)(x).squeeze(-1) with the contraction in Pallas.

    x: (B, S, D); w: (D, 1); b: (); returns (B, S) in x.dtype.
    """
    B, S, D = x.shape
    N = B * S
    x2d = x.reshape(N, D)
    w_vec = w.reshape(D)

    # Small-input fast path: pallas_call fixed costs would dominate.
    if N < min_rows_for_kernel:
        y = jnp.einsum("nd,d->n", x2d, w_vec) + b
        return y.astype(x.dtype).reshape(B, S)

    itemsize = x.dtype.itemsize
    b2d = b.reshape(1, 1).astype(jnp.float32)
    cost = pl.CostEstimate(
        flops=2 * N * D, transcendentals=0,
        bytes_accessed=N * D * itemsize + N * itemsize + D * itemsize)

    F = 128 // D if (D <= 128 and 128 % D == 0) else 0

    if F >= 1 and N % F == 0:
        # ---------------- packed lane-dense MXU path ----------------
        M = N // F                              # packed rows of 128 lanes
        xp = x2d.reshape(M, 128)                # free, contiguous view (no copy)
        # wp[c*D + d, c] = w[d]  (block-diagonal replication of w)
        eye = jnp.eye(F, dtype=x.dtype)
        wp = (eye[:, None, :] * w_vec.astype(x.dtype)[None, :, None]).reshape(128, F)

        tile_m = _pick_tile_rows(M, tile_bytes // (128 * itemsize))
        grid = (pl.cdiv(M, tile_m),)
        out = pl.pallas_call(
            _packed_readout_kernel,
            out_shape=jax.ShapeDtypeStruct((M, F), x.dtype),
            grid_spec=pltpu.PrefetchScalarGridSpec(
                num_scalar_prefetch=0,
                grid=grid,
                in_specs=[
                    pl.BlockSpec((tile_m, 128), lambda i: (i, 0)),
                    pl.BlockSpec((128, F), lambda i: (0, 0)),
                    pl.BlockSpec(memory_space=pltpu.MemorySpace.SMEM),
                ],
                out_specs=pl.BlockSpec((tile_m, F), lambda i: (i, 0)),
            ),
            compiler_params=pltpu.CompilerParams(
                dimension_semantics=("parallel",),
                vmem_limit_bytes=_vmem_limit(tile_m * 128 * itemsize,
                                             tile_m * F * itemsize,
                                             128 * F * itemsize),
            ),
            cost_estimate=cost,
        )(xp, wp, b2d)
        return out.reshape(N).reshape(B, S)

    # ---------------- generic row-wise MXU path (any N, any D) ----------------
    lane_pad = _round_up(D, 128)
    tile_n = _pick_tile_rows(N, tile_bytes // (lane_pad * itemsize))
    grid = (pl.cdiv(N, tile_n),)
    out = pl.pallas_call(
        _rowwise_readout_kernel,
        out_shape=jax.ShapeDtypeStruct((N, 1), x.dtype),
        grid_spec=pltpu.PrefetchScalarGridSpec(
            num_scalar_prefetch=0,
            grid=grid,
            in_specs=[
                pl.BlockSpec((tile_n, D), lambda i: (i, 0)),
                pl.BlockSpec((D, 1), lambda i: (0, 0)),
                pl.BlockSpec(memory_space=pltpu.MemorySpace.SMEM),
            ],
            out_specs=pl.BlockSpec((tile_n, 1), lambda i: (i, 0)),
        ),
        compiler_params=pltpu.CompilerParams(
            dimension_semantics=("parallel",),
            vmem_limit_bytes=_vmem_limit(tile_n * lane_pad * itemsize,
                                         tile_n * 128 * itemsize,
                                         lane_pad * itemsize),
        ),
        cost_estimate=cost,
    )(x2d, w.astype(x.dtype), b2d)
    return out.reshape(N).reshape(B, S)


if __name__ == "__main__":
    B, S, D = 2, 8, 32  # small shapes consistent with a CDE readout
    key = jax.random.PRNGKey(0)
    kx, kw, kb = jax.random.split(key, 3)

    x = jax.random.normal(kx, (B, S, D), dtype=jnp.float32)
    w = jax.random.normal(kw, (D, 1), dtype=jnp.float32) / jnp.sqrt(D)
    b = jax.random.normal(kb, (), dtype=jnp.float32)

    hi = jax.lax.Precision.HIGHEST

    # Smoke test: force the kernel even at tiny N (packed path, 1-step grid).
    y = jax.block_until_ready(squeeze_end_forward(x, w, b, min_rows_for_kernel=1))
    y_ref = (jnp.einsum("bsd,do->bso", x, w, precision=hi) + b).squeeze(-1)
    assert y.shape == (B, S), y.shape
    assert jnp.allclose(y, y_ref, atol=1e-4, rtol=1e-4), "mismatch vs reference (small)"

    # Larger case: multi-step grid, packed lane-dense MXU path.
    B2, S2 = 4, 8192
    x2 = jax.random.normal(kx, (B2, S2, D), dtype=jnp.float32)
    y2 = jax.block_until_ready(squeeze_end_forward(x2, w, b))
    y2_ref = (jnp.einsum("bsd,do->bso", x2, w, precision=hi) + b).squeeze(-1)
    assert y2.shape == (B2, S2), y2.shape
    assert jnp.allclose(y2, y2_ref, atol=2e-4, rtol=1e-4), "mismatch vs reference (packed)"

    # Misaligned N (N % 4 != 0): row-wise MXU path, last block partially OOB.
    B3, S3 = 3, 2731  # N = 8193
    x3 = jax.random.normal(kx, (B3, S3, D), dtype=jnp.float32)
    y3 = jax.block_until_ready(squeeze_end_forward(x3, w, b))
    y3_ref = (jnp.einsum("bsd,do->bso", x3, w, precision=hi) + b).squeeze(-1)
    assert y3.shape == (B3, S3), y3.shape
    assert jnp.allclose(y3, y3_ref, atol=2e-4, rtol=1e-4), "mismatch vs reference (rowwise)"

    print("KERNEL_OK")
</pallas_src>

<mosaic_0001>
module attributes {stable_mosaic.version = 11 : i64} {
  func.func @_packed_readout_kernel(%arg0: i32, %arg1: memref<4x128xf32, #tpu.memory_space<vmem>>, %arg2: memref<128x4xf32, #tpu.memory_space<vmem>>, %arg3: memref<1x1xf32, #tpu.memory_space<smem>>, %arg4: memref<4x4xf32, #tpu.memory_space<vmem>>) attributes {dimension_semantics = [#tpu.dimension_semantics<parallel>], iteration_bounds = array<i64: 1>, scalar_prefetch = 0 : i64, scratch_operands = 0 : i64, tpu.core_type = #tpu.core_type<tc>, window_params = [{transform_indices = @transform_0, window_bounds = array<i64: 4, 128>}, {pipeline_mode = #tpu.pipeline_mode<synchronous>, transform_indices = @transform_1, window_bounds = array<i64: 128, 4>}, {transform_indices = @transform_2, window_bounds = array<i64: 1, 1>}, {transform_indices = @transform_3, window_bounds = array<i64: 4, 4>}]} {
    %c0 = arith.constant 0 : index
    %c0_0 = arith.constant 0 : index
    %0 = vector.load %arg1[%c0, %c0_0] : memref<4x128xf32, #tpu.memory_space<vmem>>, vector<4x128xf32>
    %c0_1 = arith.constant 0 : index
    %c0_2 = arith.constant 0 : index
    %1 = vector.load %arg2[%c0_1, %c0_2] : memref<128x4xf32, #tpu.memory_space<vmem>>, vector<128x4xf32>
    %cst = arith.constant dense<0.000000e+00> : vector<4x4xf32>
    %2 = tpu.matmul %0, %1, %cst {dimension_numbers = #tpu.dot_dimension_numbers<[1], [0], [0], [1], [0, 0, 1, 1], [], []>} : vector<4x128xf32>, vector<128x4xf32>, vector<4x4xf32> -> vector<4x4xf32>
    %c0_3 = arith.constant 0 : index
    %c0_4 = arith.constant 0 : index
    %3 = memref.load %arg3[%c0_3, %c0_4] : memref<1x1xf32, #tpu.memory_space<smem>>
    %4 = vector.broadcast %3 : f32 to vector<4x4xf32>
    %5 = arith.addf %2, %4 : vector<4x4xf32>
    %c0_5 = arith.constant 0 : index
    %c0_6 = arith.constant 0 : index
    %6 = vector.load %arg4[%c0_5, %c0_6] : memref<4x4xf32, #tpu.memory_space<vmem>>, vector<4x4xf32>
    tpu.vector_store %arg4[%c0_5, %c0_6], %5 {strides = array<i32>} : memref<4x4xf32, #tpu.memory_space<vmem>>, vector<4x4xf32>,
    return
  }
  func.func @transform_0(%arg0: i32) -> (i32, i32) {
    %c0_i32 = arith.constant 0 : i32
    %c0_i32_0 = arith.constant 0 : i32
    return %arg0, %c0_i32 : i32, i32
  }
  func.func @transform_1(%arg0: i32) -> (i32, i32) {
    %c0_i32 = arith.constant 0 : i32
    %c0_i32_0 = arith.constant 0 : i32
    %c0_i32_1 = arith.constant 0 : i32
    return %c0_i32, %c0_i32_0 : i32, i32
  }
  func.func @transform_2(%arg0: i32) -> (i32, i32) {
    %c0_i32 = arith.constant 0 : i32
    %c0_i32_0 = arith.constant 0 : i32
    %c0_i32_1 = arith.constant 0 : i32
    return %c0_i32, %c0_i32_0 : i32, i32
  }
  func.func @transform_3(%arg0: i32) -> (i32, i32) {
    %c0_i32 = arith.constant 0 : i32
    %c0_i32_0 = arith.constant 0 : i32
    return %arg0, %c0_i32 : i32, i32
  }
}

</mosaic_0001>

<llo_original>
// kernel: squeeze_end_forward.1
$region0: #{squeeze_end_forward.1}
  #allocation0 [shape = 'u32[]', space=smem, size = 0x4, offset = 0x4, fixed_abs, tag = 'smem constant byte address 0x4 - core index']
  #allocation1 [shape = 'u32[72,128]{1,0:T(1,128)}', space=vmem, size = 0x9000, scoped, tag = 'internal scratch']
  #allocation2 [shape = 'f32[1,1]{1,0:T(1,128)S(6)}', space=smem, size = 0x200, scoped, tag = 'scoped memory for squeeze_end_forward.1']
  %s0 = inlined_call_operand.vmem [shape: f32[4,128], index: 0, kind: input, shape index: {}]
  %s1 = inlined_call_operand.vmem [shape: f32[128,4], index: 1, kind: input, shape index: {}]
  %s2 = inlined_call_operand.<no memory space> [shape: f32[1,1], index: 2, kind: input, shape index: {}]
  %s3 = inlined_call_operand.vmem [shape: f32[4,4], index: 3, kind: output, shape index: {}]
  %s4 = sld [smem:[#allocation0]]
  $region22: #{squeeze_end_forward.1} parent=0
    _
  %s6 = ssub.s32 1, %s4
  %s7 = scalar_select 0, %s6, %s4
  %8 = sst [smem:[#allocation2]] %s2
  // Predicated region
  $region2: #{squeeze_end_forward.1} parent=0 // pred_check
    _
  $region3: #{squeeze_end_forward.1} parent=0 // pred_check_branch
    %10 = sbr.rel (0) target = $region5
  $region4: #{squeeze_end_forward.1} parent=0 // pred_region
    _
  $region5: #{squeeze_end_forward.1} parent=0 // pred_fallthru
    _
  // Predicated region
  $region6: #{squeeze_end_forward.1} parent=0 // pred_check
    _
  $region7: #{squeeze_end_forward.1} parent=0 // pred_check_branch
    %12 = sbr.rel (0) target = $region9
  $region8: #{squeeze_end_forward.1} parent=0 // pred_region
    _
  $region9: #{squeeze_end_forward.1} parent=0 // pred_fallthru
    _
  // Predicated region
  $region10: #{squeeze_end_forward.1} parent=0 // pred_check
    _
  $region11: #{squeeze_end_forward.1} parent=0 // pred_check_branch
    %14 = sbr.rel (0) target = $region13
  $region12: #{squeeze_end_forward.1} parent=0 // pred_region
    _
  $region13: #{squeeze_end_forward.1} parent=0 // pred_fallthru
    _
  %v15 = vld [vmem:[%s0] sm:$0xf]
  %v16 = vld [vmem:[%s1] sm:$0xff]
  %v17 = vld [vmem:[%s1 + $0x8] sm:$0xff]
  %v18 = vld [vmem:[%s1 + $0x10] sm:$0xff]
  %v19 = vld [vmem:[%s1 + $0x18] sm:$0xff]
  %v20 = vld [vmem:[%s1 + $0x20] sm:$0xff]
  %v21 = vld [vmem:[%s1 + $0x28] sm:$0xff]
  %v22 = vld [vmem:[%s1 + $0x30] sm:$0xff]
  %v23 = vld [vmem:[%s1 + $0x38] sm:$0xff]
  %v24 = vld [vmem:[%s1 + $0x40] sm:$0xff]
  %v25 = vld [vmem:[%s1 + $0x48] sm:$0xff]
  %v26 = vld [vmem:[%s1 + $0x50] sm:$0xff]
  %v27 = vld [vmem:[%s1 + $0x58] sm:$0xff]
  %v28 = vld [vmem:[%s1 + $0x60] sm:$0xff]
  %v29 = vld [vmem:[%s1 + $0x68] sm:$0xff]
  %v30 = vld [vmem:[%s1 + $0x70] sm:$0xff]
  %v31 = vld [vmem:[%s1 + $0x78] sm:$0xff]
  %s32 = sld [smem:[#allocation2]]
  %v33 = vstv %s32
  %34 = vmatpush.msra.mxu0 %v31
  %35 = vmatpush.msra.mxu0 %v30
  %36 = vmatpush.msra.mxu0 %v29
  %37 = vmatpush.msra.mxu0 %v28
  %38 = vmatpush.msra.mxu0 %v27
  %39 = vmatpush.msra.mxu0 %v26
  %40 = vmatpush.msra.mxu0 %v25
  %41 = vmatpush.msra.mxu0 %v24
  %42 = vmatpush.msra.mxu0 %v23
  %43 = vmatpush.msra.mxu0 %v22
  %44 = vmatpush.msra.mxu0 %v21
  %45 = vmatpush.msra.mxu0 %v20
  %46 = vmatpush.msra.mxu0 %v19
  %47 = vmatpush.msra.mxu0 %v18
  %48 = vmatpush.msra.mxu0 %v17
  %49 = vmatpush.msra.mxu0 %v16
  %50 = vmatmul.f32.gmra.mxu0 %v15
  %v51 = vpop.f32.mrf.mxu0
  %v52 = vadd.f32 %v33, %v51
  %53 = vdwg.mxu0
  %vm54 = vcmask 27648
  %55 = vst.msk [vmem:[%s3] sm:$0xf] %vm54, %v52
  // Predicated region
  $region14: #{squeeze_end_forward.1} parent=0 // pred_check
    _
  $region15: #{squeeze_end_forward.1} parent=0 // pred_check_branch
    %57 = sbr.rel (0) target = $region17
  $region16: #{squeeze_end_forward.1} parent=0 // pred_region
    _
  $region17: #{squeeze_end_forward.1} parent=0 // pred_fallthru
    _
  // Predicated region
  $region18: #{squeeze_end_forward.1} parent=0 // pred_check
    _
  $region19: #{squeeze_end_forward.1} parent=0 // pred_check_branch
    %59 = sbr.rel (0) target = $region21
  $region20: #{squeeze_end_forward.1} parent=0 // pred_region
    _
  $region21: #{squeeze_end_forward.1} parent=0 // pred_fallthru
    _

</llo_original>
